<compile_context>
chip_gen: v7x
topology: tpu7x:2x2x1
jax: 0.10.0
libtpu: 0.0.40
codegen_flags: <defaults>
</compile_context>

<pallas_src>
import functools

import jax
import jax.numpy as jnp
from jax.experimental import pallas as pl
from jax.experimental.pallas import tpu as pltpu

EPS = 1e-9
LANE = 128
SUBLANE = 8


def _ceil_to(v, m):
    return (v + m - 1) // m * m


def _vmem_limit_bytes():
    """Per-generation scoped-VMEM limit: ~64 MiB on 128-MiB parts (v5e/v6e),
    ~40 MiB on v7x (64 MiB physical)."""
    cap = 128 << 20
    try:
        cap = int(pltpu.get_tpu_info().vmem_capacity_bytes)
    except Exception:
        pass
    return min(cap * 5 // 8, 64 << 20)


# ----------------------------------------------------------------------------
# Single-pass kernel: whole batch resident per feature tile (BatchNorm stats
# need the full batch axis).
# ----------------------------------------------------------------------------
def _dice_kernel(x_ref, alpha_ref, o_ref, *, eps):
    # Reduction pass: per-column batch mean and biased variance.
    x = x_ref[...]                                      # (N, TF)
    mean = jnp.mean(x, axis=0, keepdims=True)           # (1, TF)
    var = jnp.mean(jnp.square(x - mean), axis=0, keepdims=True)
    rstd = jax.lax.rsqrt(var + eps)
    # Elementwise pass re-reads the VMEM tile so neither `x` nor `x - mean`
    # needs to stay live in vregs across the reduction (VMEM re-load is cheap:
    # 3 vld slots/cycle; avoids spill traffic at large blocks).
    x = x_ref[...]
    p = jax.nn.sigmoid((x - mean) * rstd)                # exp on the EUP slot
    alpha = alpha_ref[...]                               # (1, TF), broadcasts
    # Fused form of x*p + alpha*x*(1-p).
    o_ref[...] = x * (alpha + (1.0 - alpha) * p)


def _plan_single_pass(f, n, tile_budget):
    """Feature-tile width for the single-pass kernel (multiple of 128 lanes,
    or f itself when f <= 128), or None if even a full-batch 128-lane block
    exceeds the VMEM tile budget."""
    if f <= LANE:
        return f if 16 * n * f <= tile_budget else None
    per_lane_bytes = 16 * n          # 2 buffers x (in + out) x n rows x 4 B
    tf_budget = (tile_budget // per_lane_bytes) // LANE * LANE
    if tf_budget < LANE:
        return None
    tf = min((f // LANE) * LANE, tf_budget)
    # Keep >= 2 (prefer >= 4) feature blocks so the "parallel" grid axis can
    # shard across both TensorCores on v7x; blocks stay lane-dense.
    f_lanes = _ceil_to(f, LANE)
    for blocks in (4, 2):
        if f_lanes >= blocks * LANE:
            tf = min(tf, _ceil_to(pl.cdiv(f, blocks), LANE))
            break
    return max(tf, LANE)


# ----------------------------------------------------------------------------
# Two-pass fallback for batches too large to hold whole in VMEM:
#   pass 1 accumulates per-feature sum / sum-of-squares over batch tiles,
#   pass 2 applies the normalization + Dice gate elementwise.
# ----------------------------------------------------------------------------
def _stats_kernel(x_ref, sum_ref, ssq_ref, *, n_total, tn):
    i = pl.program_id(1)                                 # batch-tile index

    @pl.when(i == 0)
    def _():
        sum_ref[...] = jnp.zeros_like(sum_ref)
        ssq_ref[...] = jnp.zeros_like(ssq_ref)

    x = x_ref[...]                                       # (TN, TF)
    rows = i * tn + jax.lax.broadcasted_iota(jnp.int32, x.shape, 0)
    xm = jnp.where(rows < n_total, x, 0.0).astype(jnp.float32)  # mask OOB rows
    sum_ref[...] += jnp.sum(xm, axis=0, keepdims=True)
    ssq_ref[...] += jnp.sum(xm * xm, axis=0, keepdims=True)


def _apply_kernel(x_ref, mean_ref, rstd_ref, alpha_ref, o_ref):
    x = x_ref[...]
    p = jax.nn.sigmoid((x - mean_ref[...]) * rstd_ref[...])
    alpha = alpha_ref[...]
    o_ref[...] = x * (alpha + (1.0 - alpha) * p)


def _plan_two_pass(f, n, tile_budget):
    tf = f if f <= LANE else min((f // LANE) * LANE, 4 * LANE)
    if n <= SUBLANE:
        tn = n
    else:
        tn = max((tile_budget // (16 * tf)) // SUBLANE * SUBLANE, SUBLANE)
        tn = min(tn, (n // SUBLANE) * SUBLANE)
    return tn, tf


# ----------------------------------------------------------------------------
# Wrapper
# ----------------------------------------------------------------------------
def dice(x, alpha, eps=EPS, *, max_block_bytes=None):
    """Dice activation.  x: (N, F) float32; alpha: (F,) float32 (the
    nn.Parameter).  `max_block_bytes` overrides the VMEM tile budget
    (used by tests to force the two-pass path)."""
    n, f = x.shape
    vmem_limit = _vmem_limit_bytes()
    tile_budget = (max_block_bytes if max_block_bytes is not None
                   else max(vmem_limit - (8 << 20), vmem_limit // 2))
    alpha2d = alpha.reshape(1, f).astype(x.dtype)

    tf = _plan_single_pass(f, n, tile_budget)
    if tf is not None:
        grid = (pl.cdiv(f, tf),)
        cost = pl.CostEstimate(flops=10 * n * f, transcendentals=n * f,
                               bytes_accessed=8 * n * f + 4 * f)
        return pl.pallas_call(
            functools.partial(_dice_kernel, eps=eps),
            out_shape=jax.ShapeDtypeStruct((n, f), x.dtype),
            grid=grid,
            in_specs=[pl.BlockSpec((n, tf), lambda j: (0, j)),
                      pl.BlockSpec((1, tf), lambda j: (0, j))],
            out_specs=pl.BlockSpec((n, tf), lambda j: (0, j)),
            compiler_params=pltpu.CompilerParams(
                dimension_semantics=("parallel",),
                vmem_limit_bytes=vmem_limit),
            cost_estimate=cost,
        )(x, alpha2d)

    # -- two-pass fallback: batch does not fit a single full-batch VMEM block.
    # TODO(synk): sum/sum-of-squares variance can cancel when |mean| >> std;
    # acceptable for BatchNorm-style inputs (guarded by max(var, 0)).
    tn, tf = _plan_two_pass(f, n, tile_budget)
    f_tiles = pl.cdiv(f, tf)
    n_tiles = pl.cdiv(n, tn)

    sums, ssqs = pl.pallas_call(
        functools.partial(_stats_kernel, n_total=n, tn=tn),
        out_shape=(jax.ShapeDtypeStruct((1, f), jnp.float32),
                   jax.ShapeDtypeStruct((1, f), jnp.float32)),
        grid=(f_tiles, n_tiles),                      # reduction axis last
        in_specs=[pl.BlockSpec((tn, tf), lambda j, i: (i, j))],
        out_specs=(pl.BlockSpec((1, tf), lambda j, i: (0, j)),
                   pl.BlockSpec((1, tf), lambda j, i: (0, j))),
        compiler_params=pltpu.CompilerParams(
            dimension_semantics=("parallel", "arbitrary"),
            vmem_limit_bytes=vmem_limit),
    )(x)

    # Tiny (1, F) arrays; negligible HBM traffic.
    mean = sums / n
    var = jnp.maximum(ssqs / n - mean * mean, 0.0)
    rstd = jax.lax.rsqrt(var + eps)

    return pl.pallas_call(
        _apply_kernel,
        out_shape=jax.ShapeDtypeStruct((n, f), x.dtype),
        grid=(f_tiles, n_tiles),
        in_specs=[pl.BlockSpec((tn, tf), lambda j, i: (i, j)),
                  pl.BlockSpec((1, tf), lambda j, i: (0, j)),
                  pl.BlockSpec((1, tf), lambda j, i: (0, j)),
                  pl.BlockSpec((1, tf), lambda j, i: (0, j))],
        out_specs=pl.BlockSpec((tn, tf), lambda j, i: (i, j)),
        compiler_params=pltpu.CompilerParams(
            dimension_semantics=("parallel", "parallel"),
            vmem_limit_bytes=vmem_limit),
        cost_estimate=pl.CostEstimate(flops=10 * n * f, transcendentals=n * f,
                                      bytes_accessed=12 * n * f + 16 * f),
    )(x, mean, rstd, alpha2d)


def dice_reference(x, alpha, eps=EPS):
    mean = jnp.mean(x, axis=0, keepdims=True)
    var = jnp.mean((x - mean) ** 2, axis=0, keepdims=True)
    xn = (x - mean) / jnp.sqrt(var + eps)
    p = jax.nn.sigmoid(xn)
    return x * p + alpha[None, :] * x * (1.0 - p)


if __name__ == "__main__":
    key = jax.random.PRNGKey(0)
    k1, k2, k3, k4, k5 = jax.random.split(key, 5)

    # Case 1: canonical small DIN shape (batch=8, num_features=32); the block
    # equals the full (unpadded) array — no wrapper pad/slice HBM passes.
    x1 = jax.random.normal(k1, (8, 32), dtype=jnp.float32)
    a1 = jnp.ones((32,), dtype=jnp.float32)        # Parameter(...).fill_(1.0)
    o1 = jax.block_until_ready(dice(x1, a1))
    assert o1.shape == (8, 32)
    assert jnp.allclose(o1, dice_reference(x1, a1), atol=1e-5, rtol=1e-5)

    # Case 2: multi-tile feature axis (F=384 -> tiles of 256 + 128), keeping
    # >= 2 blocks on the "parallel" axis (v7x megacore sharding).
    x2 = jax.random.normal(k2, (64, 384), dtype=jnp.float32)
    a2 = jax.random.uniform(k3, (384,), dtype=jnp.float32)
    o2 = jax.block_until_ready(dice(x2, a2))
    assert jnp.allclose(o2, dice_reference(x2, a2), atol=1e-5, rtol=1e-5)

    # Case 3: ragged F — no padding; the last tile's store is lane-masked and
    # garbage lanes never contaminate real columns (per-column statistics).
    x3 = jax.random.normal(k4, (64, 200), dtype=jnp.float32)
    a3 = jax.random.uniform(k5, (200,), dtype=jnp.float32)
    o3 = jax.block_until_ready(dice(x3, a3))
    assert jnp.allclose(o3, dice_reference(x3, a3), atol=1e-5, rtol=1e-5)

    # Case 4: force the two-pass (stats accumulate, then apply) fallback used
    # when the batch is too large for a full-batch VMEM block; ragged N and F
    # exercise the row-mask and masked stores.
    x4 = jax.random.normal(k1, (272, 200), dtype=jnp.float32)
    a4 = jax.random.uniform(k2, (200,), dtype=jnp.float32)
    o4 = jax.block_until_ready(dice(x4, a4, max_block_bytes=256 * 1024))
    assert jnp.allclose(o4, dice_reference(x4, a4), atol=1e-4, rtol=1e-4)

    print("KERNEL_OK")
</pallas_src>

<mosaic_0001>
module attributes {stable_mosaic.version = 11 : i64} {
  func.func @_dice_kernel(%arg0: i32, %arg1: memref<8x32xf32, #tpu.memory_space<vmem>>, %arg2: memref<1x32xf32, #tpu.memory_space<vmem>>, %arg3: memref<8x32xf32, #tpu.memory_space<vmem>>) attributes {dimension_semantics = [#tpu.dimension_semantics<parallel>], iteration_bounds = array<i64: 1>, scalar_prefetch = 0 : i64, scratch_operands = 0 : i64, tpu.core_type = #tpu.core_type<tc>, window_params = [{transform_indices = @transform_0, window_bounds = array<i64: 8, 32>}, {transform_indices = @transform_1, window_bounds = array<i64: 1, 32>}, {transform_indices = @transform_2, window_bounds = array<i64: 8, 32>}]} {
    %c0 = arith.constant 0 : index
    %c0_0 = arith.constant 0 : index
    %0 = vector.load %arg1[%c0, %c0_0] : memref<8x32xf32, #tpu.memory_space<vmem>>, vector<8x32xf32>
    %cst = arith.constant dense<0.000000e+00> : vector<32xf32>
    %1 = vector.multi_reduction <add>, %0, %cst [0] : vector<8x32xf32> to vector<32xf32>
    %2 = vector.shape_cast %1 : vector<32xf32> to vector<1x32xf32>
    %cst_1 = arith.constant 8.000000e+00 : f32
    %3 = vector.broadcast %cst_1 : f32 to vector<1x32xf32>
    %4 = arith.divf %2, %3 : vector<1x32xf32>
    %5 = vector.broadcast %4 : vector<1x32xf32> to vector<8x32xf32>
    %6 = arith.subf %0, %5 : vector<8x32xf32>
    %7 = arith.mulf %6, %6 : vector<8x32xf32>
    %cst_2 = arith.constant dense<0.000000e+00> : vector<32xf32>
    %8 = vector.multi_reduction <add>, %7, %cst_2 [0] : vector<8x32xf32> to vector<32xf32>
    %9 = vector.shape_cast %8 : vector<32xf32> to vector<1x32xf32>
    %cst_3 = arith.constant 8.000000e+00 : f32
    %10 = vector.broadcast %cst_3 : f32 to vector<1x32xf32>
    %11 = arith.divf %9, %10 : vector<1x32xf32>
    %cst_4 = arith.constant 9.99999971E-10 : f32
    %12 = vector.broadcast %cst_4 : f32 to vector<1x32xf32>
    %13 = arith.addf %11, %12 : vector<1x32xf32>
    %14 = math.rsqrt %13 : vector<1x32xf32>
    %c0_5 = arith.constant 0 : index
    %c0_6 = arith.constant 0 : index
    %15 = vector.load %arg1[%c0_5, %c0_6] : memref<8x32xf32, #tpu.memory_space<vmem>>, vector<8x32xf32>
    %16 = vector.broadcast %4 : vector<1x32xf32> to vector<8x32xf32>
    %17 = arith.subf %15, %16 : vector<8x32xf32>
    %18 = vector.broadcast %14 : vector<1x32xf32> to vector<8x32xf32>
    %19 = arith.mulf %17, %18 : vector<8x32xf32>
    %20 = arith.negf %19 : vector<8x32xf32>
    %21 = math.exp %20 : vector<8x32xf32>
    %cst_7 = arith.constant 1.000000e+00 : f32
    %22 = vector.broadcast %cst_7 : f32 to vector<8x32xf32>
    %23 = arith.addf %22, %21 : vector<8x32xf32>
    %24 = arith.divf %22, %23 : vector<8x32xf32>
    %c0_8 = arith.constant 0 : index
    %c0_9 = arith.constant 0 : index
    %25 = vector.load %arg2[%c0_8, %c0_9] : memref<1x32xf32, #tpu.memory_space<vmem>>, vector<1x32xf32>
    %cst_10 = arith.constant 1.000000e+00 : f32
    %26 = vector.broadcast %cst_10 : f32 to vector<1x32xf32>
    %27 = arith.subf %26, %25 : vector<1x32xf32>
    %28 = vector.broadcast %27 : vector<1x32xf32> to vector<8x32xf32>
    %29 = arith.mulf %28, %24 : vector<8x32xf32>
    %30 = vector.broadcast %25 : vector<1x32xf32> to vector<8x32xf32>
    %31 = arith.addf %30, %29 : vector<8x32xf32>
    %32 = arith.mulf %15, %31 : vector<8x32xf32>
    %c0_11 = arith.constant 0 : index
    %c0_12 = arith.constant 0 : index
    %33 = vector.load %arg3[%c0_11, %c0_12] : memref<8x32xf32, #tpu.memory_space<vmem>>, vector<8x32xf32>
    tpu.vector_store %arg3[%c0_11, %c0_12], %32 {strides = array<i32>} : memref<8x32xf32, #tpu.memory_space<vmem>>, vector<8x32xf32>,
    return
  }
  func.func @transform_0(%arg0: i32) -> (i32, i32) {
    %c0_i32 = arith.constant 0 : i32
    %c0_i32_0 = arith.constant 0 : i32
    return %c0_i32, %arg0 : i32, i32
  }
  func.func @transform_1(%arg0: i32) -> (i32, i32) {
    %c0_i32 = arith.constant 0 : i32
    %c0_i32_0 = arith.constant 0 : i32
    return %c0_i32, %arg0 : i32, i32
  }
  func.func @transform_2(%arg0: i32) -> (i32, i32) {
    %c0_i32 = arith.constant 0 : i32
    %c0_i32_0 = arith.constant 0 : i32
    return %c0_i32, %arg0 : i32, i32
  }
}

</mosaic_0001>

<llo_original>
// kernel: tpu_custom_call.1
$region0: #{tpu_custom_call.1}
  #allocation0 [shape = 'u32[]', space=smem, size = 0x4, offset = 0x4, fixed_abs, tag = 'smem constant byte address 0x4 - core index']
  #allocation1 [shape = 'u32[144,128]{1,0:T(1,128)}', space=vmem, size = 0x12000, scoped, tag = 'internal scratch']
  %s0 = inlined_call_operand.hbm [shape: f32[8,32], index: 0, kind: input, shape index: {}]
  %s1 = inlined_call_operand.hbm [shape: f32[1,32], index: 1, kind: input, shape index: {}]
  %s2 = inlined_call_operand.hbm [shape: f32[8,32], index: 2, kind: output, shape index: {}]
  %s3 = sld [smem:[#allocation0]]
  $region26: #{tpu_custom_call.1} parent=0
    _
  %s5 = ssub.s32 1, %s3
  %s6 = scalar_select 0, %s5, %s3
  $region1: #{tpu_custom_call.1} parent=0
    #allocation2 [shape = 'u8[4096]{0}', space=vmem, size = 0x1000, scoped, tag = 'input window, operand 0, single buffered']
    #allocation3 [shape = 's32[1]{0}', space=sflag, size = 0x4, scoped, tag = 'scoped memory for tpu_custom_call.1']
    #allocation4 [shape = 's32[1]{0}', space=sflag, size = 0x4, scoped, tag = 'scoped memory for tpu_custom_call.1']
    #allocation5 [shape = 'u8[512]{0}', space=vmem, size = 0x400, scoped, tag = 'input window, operand 1, single buffered']
    #allocation6 [shape = 's32[1]{0}', space=sflag, size = 0x4, scoped, tag = 'scoped memory for tpu_custom_call.1']
    #allocation7 [shape = 'u8[4096]{0}', space=vmem, size = 0x1000, scoped, tag = 'output window, operand 0, single buffered']
    %7 = vsyncpa [#allocation3], 0
    %8 = vsyncpa [#allocation6], 0
    %9 = vsyncpa [#allocation4], 0
    // Predicated region
    $region2: #{tpu_custom_call.1} parent=1 // pred_check
      _
    $region3: #{tpu_custom_call.1} parent=1 // pred_check_branch
      %11 = sbr.rel (0) target = $region5
    $region4: #{tpu_custom_call.1} parent=1 // pred_region
      %s13 = ssub.s32 128, 128
      %14 = vsyncadd [#allocation3], %s13
      %s16 = sshll.u32 [#allocation2], 4
      %s17 = int_to_ptr.vmem [resolvable:$true] %s16
      %19 = dma.hbm_to_vmem [thread:$0]  %s0, 128, %s17, [#allocation3]
    $region5: #{tpu_custom_call.1} parent=1 // pred_fallthru
      _
    // Predicated region
    $region6: #{tpu_custom_call.1} parent=1 // pred_check
      _
    $region7: #{tpu_custom_call.1} parent=1 // pred_check_branch
      %21 = sbr.rel (0) target = $region9
    $region8: #{tpu_custom_call.1} parent=1 // pred_region
      %s23 = ssub.s32 16, 16
      %24 = vsyncadd [#allocation6], %s23
      %s26 = sshll.u32 [#allocation5], 4
      %s27 = int_to_ptr.vmem [resolvable:$true] %s26
      %29 = dma.hbm_to_vmem [thread:$0]  %s1, 16, %s27, [#allocation6]
    $region9: #{tpu_custom_call.1} parent=1 // pred_fallthru
      _
    // Predicated region
    $region10: #{tpu_custom_call.1} parent=1 // pred_check
      _
    $region11: #{tpu_custom_call.1} parent=1 // pred_check_branch
      %31 = sbr.rel (0) target = $region13
    $region12: #{tpu_custom_call.1} parent=1 // pred_region
      %32 = dma.done [#allocation3], 128
    $region13: #{tpu_custom_call.1} parent=1 // pred_fallthru
      _
    // Predicated region
    $region14: #{tpu_custom_call.1} parent=1 // pred_check
      _
    $region15: #{tpu_custom_call.1} parent=1 // pred_check_branch
      %34 = sbr.rel (0) target = $region17
    $region16: #{tpu_custom_call.1} parent=1 // pred_region
      %35 = dma.done [#allocation6], 16
    $region17: #{tpu_custom_call.1} parent=1 // pred_fallthru
      _
    %v36 = vld [vmem:[#allocation2] sm:$0xff]
    %vm37 = vcmask 261120
    %v38 = vsel %vm37, %v36, 0.0
    %v39 = vrot.slane %v38, 4
    %v40 = vadd.f32 %v38, %v39
    %v41 = vrot.slane %v40, 2
    %v42 = vadd.f32 %v40, %v41
    %v43 = vrot.slane %v42, 1
    %v44 = vadd.f32 %v42, %v43
    %v45 = vrcp.pop 8.0
    %v46 = vmul.f32 %v44, %v45
    %v47 = vsub.f32 %v36, %v46
    %v48 = vmul.f32 %v47, %v47
    %v49 = vsel %vm37, %v48, 0.0
    %v50 = vrot.slane %v49, 4
    %v51 = vadd.f32 %v49, %v50
    %v52 = vrot.slane %v51, 2
    %v53 = vadd.f32 %v51, %v52
    %v54 = vrot.slane %v53, 1
    %v55 = vadd.f32 %v53, %v54
    %v56 = vmul.f32 %v55, %v45
    %v57 = vadd.f32 %v56, 1e-09
    %v58 = vrsqrt.pop %v57
    %v59 = vmul.f32 %v47, %v58
    %v60 = vxor.u32 %v59, 2147483648
    %v61 = vmul.f32 %v60, 1.442695
    %v62 = vpow.pop %v61
    %v63 = vadd.f32 %v62, 1.0
    %v64 = vrcp.pop %v63
    %v65 = vmul.f32 1.0, %v64
    %v66 = vld [vmem:[#allocation5] sm:$0x1]
    %v67 = vsub.f32 1.0, %v66
    %v69 = vlaneseq
    %v70 = vshrl.u32 %v69, 7
    %v71 = vsub.s32 0, %v70
    %v72 = vrot.slane %v67, %v71
    %v74 = vmul.f32 %v72, %v65
    %v76 = vlaneseq
    %v77 = vshrl.u32 %v76, 7
    %v78 = vsub.s32 0, %v77
    %v79 = vrot.slane %v66, %v78
    %v81 = vadd.f32 %v79, %v74
    %v82 = vmul.f32 %v36, %v81
    %83 = vst.msk [vmem:[#allocation7] sm:$0xff] %vm37, %v82
    // Predicated region
    $region18: #{tpu_custom_call.1} parent=1 // pred_check
      _
    $region19: #{tpu_custom_call.1} parent=1 // pred_check_branch
      %85 = sbr.rel (0) target = $region21
    $region20: #{tpu_custom_call.1} parent=1 // pred_region
      %s87 = ssub.s32 128, 128
      %88 = vsyncadd [#allocation4], %s87
      %s90 = sshll.u32 [#allocation7], 4
      %s91 = int_to_ptr.vmem [resolvable:$true] %s90
      %93 = dma.vmem_to_hbm [thread:$0]  %s91, 128, %s2, [#allocation4]
    $region21: #{tpu_custom_call.1} parent=1 // pred_fallthru
      _
    // Predicated region
    $region22: #{tpu_custom_call.1} parent=1 // pred_check
      _
    $region23: #{tpu_custom_call.1} parent=1 // pred_check_branch
      %95 = sbr.rel (0) target = $region25
    $region24: #{tpu_custom_call.1} parent=1 // pred_region
      %96 = dma.done [#allocation4], 128
    $region25: #{tpu_custom_call.1} parent=1 // pred_fallthru
      _
    %97 = vsyncpa [#allocation3], 1
    %98 = vsyncpa [#allocation6], 1
    %99 = vsyncpa [#allocation4], 1

</llo_original>
